<compile_context>
chip_gen: v6e
topology: v6e:2x2x1
jax: 0.10.0
libtpu: 0.0.40
codegen_flags: <defaults>
</compile_context>

<pallas_src>
import jax
import jax.numpy as jnp
from jax import lax
from jax.experimental import pallas as pl
from jax.experimental.pallas import tpu as pltpu


# -----------------------------------------------------------------------------
# Kernel
# -----------------------------------------------------------------------------
def bert_embeddings_kernel(sel_ref, scale_ref, emb_ref, out_ref):
    """Single-step fused embedding kernel.

    sel_ref:   (R, 1)  int32 VMEM  row index into the combined embedding table
    scale_ref: (R, 1)  f32   VMEM  per-row scale (X_numerical value, or 1.0)
    emb_ref:   (Wp, H) f32   VMEM  [num_embeddings ; word_embeddings ; zero pad]
    out_ref:   (R, H)  f32   VMEM  concatenated embeddings, row-major over (B, T)

    Computes out[r, :] = scale[r] * emb[sel[r], :].
    """
    R = sel_ref.shape[0]
    Wp = emb_ref.shape[0]

    # One-hot row selector (VPU: iota + compare), then one MXU matmul performs
    # the gather for all B*T output rows at once.  fp32 contraction keeps the
    # lookup exact (one-hot entries are exactly 0.0 / 1.0).
    col = lax.broadcasted_iota(jnp.int32, (R, Wp), 1)
    onehot = (col == sel_ref[...]).astype(jnp.float32)              # (R, Wp)
    gathered = jnp.dot(onehot, emb_ref[...],
                       preferred_element_type=jnp.float32,
                       precision=lax.Precision.HIGHEST)             # (R, H)

    # Numerical-feature scaling (categorical rows carry scale = 1.0), then a
    # single coalesced full-tile store.
    out_ref[...] = (gathered * scale_ref[...]).astype(out_ref.dtype)


# -----------------------------------------------------------------------------
# Wrapper
# -----------------------------------------------------------------------------
def bert_embeddings(X_numerical, X_categorical, word_embeddings, num_embeddings):
    """Pallas forward of BertEmbeddings.

    X_numerical:     (B, n_num)          float32
    X_categorical:   (B, n_cat)          int32, values in [0, vocab_size]
    word_embeddings: (vocab_size + 1, H) float32
    num_embeddings:  (1, n_num, H)       float32
    returns:         (B, n_num + n_cat, H) float32
    """
    B, n_num = X_numerical.shape
    _, n_cat = X_categorical.shape
    V, H = word_embeddings.shape
    T = n_num + n_cat
    R = B * T
    W = n_num + V
    Wp = ((W + 7) // 8) * 8  # pad contraction dim to a sublane multiple

    # Combined table: rows [0, n_num) are the numerical-feature prototype
    # embeddings, rows [n_num, n_num + V) the word-embedding table, then zeros.
    emb = jnp.concatenate(
        [num_embeddings.reshape(n_num, H), word_embeddings], axis=0)
    emb = jnp.pad(emb, ((0, Wp - W), (0, 0))).astype(jnp.float32)

    # Per output row: which table row to fetch and what to scale it by.  The
    # row order (numerical features first, then categorical tokens, per batch)
    # realises torch.cat([X_num_embeds, X_categ_embeds], axis=1).
    num_sel = jnp.broadcast_to(
        jnp.arange(n_num, dtype=jnp.int32)[None, :], (B, n_num))
    cat_sel = X_categorical.astype(jnp.int32) + n_num
    sel = jnp.concatenate([num_sel, cat_sel], axis=1).reshape(R, 1)

    scale = jnp.concatenate(
        [X_numerical.astype(jnp.float32), jnp.ones((B, n_cat), jnp.float32)],
        axis=1).reshape(R, 1)

    vmem = pl.BlockSpec(memory_space=pltpu.MemorySpace.VMEM)
    out2d = pl.pallas_call(
        bert_embeddings_kernel,
        out_shape=jax.ShapeDtypeStruct((R, H), jnp.float32),
        in_specs=[vmem, vmem, vmem],
        out_specs=vmem,
    )(sel, scale, emb)

    # Dropout(p=0.0) / eval mode -> identity.  Free wrapper reshape back to the
    # module's (B, n_num + n_cat, H) output layout.
    return out2d.reshape(B, T, H)


# -----------------------------------------------------------------------------
# Plain-JAX reference mirroring the torch forward
# -----------------------------------------------------------------------------
def _reference(X_numerical, X_categorical, word_embeddings, num_embeddings):
    X_categ_embeds = word_embeddings[X_categorical]             # (B, n_cat, H)
    X_num_embeds = X_numerical[:, :, None] * num_embeddings     # (B, n_num, H)
    return jnp.concatenate([X_num_embeds, X_categ_embeds], axis=1)


if __name__ == "__main__":
    B = 2
    N_NUM = 4        # n_numerical_features
    N_CAT = 4        # number of categorical tokens per sample
    HIDDEN = 16      # hidden_size (module default)
    VOCAB = 11       # word_embeddings has VOCAB + 1 = 12 rows

    key = jax.random.PRNGKey(0)
    k_word, k_num, k_xn, k_xc = jax.random.split(key, 4)

    # nn.Embedding default init ~ N(0, 1); num_embeddings ~ N(0, initializer_range)
    word_embeddings = jax.random.normal(k_word, (VOCAB + 1, HIDDEN), jnp.float32)
    num_embeddings = 0.02 * jax.random.normal(k_num, (1, N_NUM, HIDDEN), jnp.float32)

    X_numerical = jax.random.normal(k_xn, (B, N_NUM), jnp.float32)
    X_categorical = jax.random.randint(k_xc, (B, N_CAT), 0, VOCAB + 1, jnp.int32)

    out = bert_embeddings(X_numerical, X_categorical, word_embeddings, num_embeddings)
    out = jax.block_until_ready(out)

    ref = _reference(X_numerical, X_categorical, word_embeddings, num_embeddings)
    assert out.shape == (B, N_NUM + N_CAT, HIDDEN)
    assert jnp.allclose(out, ref, atol=1e-5, rtol=1e-5), "mismatch vs reference"

    print("KERNEL_OK")
</pallas_src>

<mosaic_0001>
module attributes {stable_mosaic.version = 11 : i64} {
  func.func @bert_embeddings_kernel(%arg0: memref<16x1xi32, #tpu.memory_space<vmem>>, %arg1: memref<16x1xf32, #tpu.memory_space<vmem>>, %arg2: memref<16x16xf32, #tpu.memory_space<vmem>>, %arg3: memref<16x16xf32, #tpu.memory_space<vmem>>) attributes {dimension_semantics = [], scalar_prefetch = 0 : i64, scratch_operands = 0 : i64, tpu.core_type = #tpu.core_type<tc>} {
    %0 = tpu.iota {dimensions = array<i32: 1>} : vector<16x16xi32>
    %c0 = arith.constant 0 : index
    %c0_0 = arith.constant 0 : index
    %1 = vector.load %arg0[%c0, %c0_0] : memref<16x1xi32, #tpu.memory_space<vmem>>, vector<16x1xi32>
    %2 = vector.broadcast %1 : vector<16x1xi32> to vector<16x16xi32>
    %3 = arith.cmpi eq, %0, %2 : vector<16x16xi32>
    %4 = arith.extui %3 : vector<16x16xi1> to vector<16x16xi32>
    %5 = arith.sitofp %4 : vector<16x16xi32> to vector<16x16xf32>
    %c0_1 = arith.constant 0 : index
    %c0_2 = arith.constant 0 : index
    %6 = vector.load %arg2[%c0_1, %c0_2] : memref<16x16xf32, #tpu.memory_space<vmem>>, vector<16x16xf32>
    %cst = arith.constant dense<0.000000e+00> : vector<16x16xf32>
    %7 = tpu.matmul %5, %6, %cst {dimension_numbers = #tpu.dot_dimension_numbers<[1], [0], [0], [1], [0, 0, 1, 1], [], []>, precision = #tpu.contract_precision<fp32>} : vector<16x16xf32>, vector<16x16xf32>, vector<16x16xf32> -> vector<16x16xf32>
    %c0_3 = arith.constant 0 : index
    %c0_4 = arith.constant 0 : index
    %8 = vector.load %arg1[%c0_3, %c0_4] : memref<16x1xf32, #tpu.memory_space<vmem>>, vector<16x1xf32>
    %9 = vector.broadcast %8 : vector<16x1xf32> to vector<16x16xf32>
    %10 = arith.mulf %7, %9 : vector<16x16xf32>
    %c0_5 = arith.constant 0 : index
    %c0_6 = arith.constant 0 : index
    %11 = vector.load %arg3[%c0_5, %c0_6] : memref<16x16xf32, #tpu.memory_space<vmem>>, vector<16x16xf32>
    tpu.vector_store %arg3[%c0_5, %c0_6], %10 {strides = array<i32>} : memref<16x16xf32, #tpu.memory_space<vmem>>, vector<16x16xf32>,
    return
  }
}

</mosaic_0001>

<llo_original>
// kernel: tpu_custom_call.1
$region0: #{tpu_custom_call.1}
  #allocation0 [shape = 'u32[]', space=smem, size = 0x4, offset = 0x4, fixed_abs, tag = 'smem constant byte address 0x4 - core index']
  #allocation1 [shape = 'u32[144,128]{1,0:T(1,128)}', space=vmem, size = 0x12000, scoped, tag = 'internal scratch']
  %s0 = inlined_call_operand.vmem [shape: s32[16,1], index: 0, kind: input, shape index: {}]
  %s1 = inlined_call_operand.vmem [shape: f32[16,1], index: 1, kind: input, shape index: {}]
  %s2 = inlined_call_operand.vmem [shape: f32[16,16], index: 2, kind: input, shape index: {}]
  %s3 = inlined_call_operand.hbm [shape: f32[16,16], index: 3, kind: output, shape index: {}]
  %s4 = sld [smem:[#allocation0]]
  $region22: #{tpu_custom_call.1} parent=0
    _
  %s6 = ssub.s32 1, %s4
  %s7 = scalar_select 0, %s6, %s4
  $region1: #{tpu_custom_call.1} parent=0
    #allocation2 [shape = 'u8[8192]{0}', space=vmem, size = 0x2000, scoped, tag = 'output window, operand 0, single buffered']
    #allocation3 [shape = 's32[1]{0}', space=sflag, size = 0x4, scoped, tag = 'scoped memory for tpu_custom_call.1']
    %8 = vsyncpa [#allocation3], 0
    // Predicated region
    $region2: #{tpu_custom_call.1} parent=1 // pred_check
      _
    $region3: #{tpu_custom_call.1} parent=1 // pred_check_branch
      %10 = sbr.rel (0) target = $region5
    $region4: #{tpu_custom_call.1} parent=1 // pred_region
      _
    $region5: #{tpu_custom_call.1} parent=1 // pred_fallthru
      _
    // Predicated region
    $region6: #{tpu_custom_call.1} parent=1 // pred_check
      _
    $region7: #{tpu_custom_call.1} parent=1 // pred_check_branch
      %12 = sbr.rel (0) target = $region9
    $region8: #{tpu_custom_call.1} parent=1 // pred_region
      _
    $region9: #{tpu_custom_call.1} parent=1 // pred_fallthru
      _
    // Predicated region
    $region10: #{tpu_custom_call.1} parent=1 // pred_check
      _
    $region11: #{tpu_custom_call.1} parent=1 // pred_check_branch
      %14 = sbr.rel (0) target = $region13
    $region12: #{tpu_custom_call.1} parent=1 // pred_region
      _
    $region13: #{tpu_custom_call.1} parent=1 // pred_fallthru
      _
    %v15 = vlaneseq
    %v16 = vand.u32 %v15, 127
    %v17 = vld [vmem:[%s0] sm:$0xff]
    %v18 = vld [vmem:[%s0 + $0x8] sm:$0xff]
    %19 = vset.pattern.permute.xlu0 0
    %20 = vperm.xlu0 %19, %v17
    %v21 = vpop.permute.xlu0 %20
    %22 = vset.pattern.permute.xlu0 0
    %23 = vperm.xlu0 %22, %v18
    %v24 = vpop.permute.xlu0 %23
    %vm25 = vcmp.eq.s32.totalorder %v16, %v21
    %vm26 = vcmp.eq.s32.totalorder %v16, %v24
    %v27 = vsel %vm25, 1, 0
    %v28 = vsel %vm26, 1, 0
    %v29 = vcvt.s32.f32 %v27
    %v30 = vcvt.s32.f32 %v28
    %v31 = vld [vmem:[%s2] sm:$0xff]
    %v32 = vld [vmem:[%s2 + $0x8] sm:$0xff]
    %vm33 = vcmask 130048
    %v35 = vsel %vm33, %v29, 0
    %v38 = vsel %vm33, %v30, 0
    %40 = vmatprep.subr.mxu0 0.0
    %41 = vmatpush1.msra.mxu0 0.0
    %42 = vmatprep.subr.mxu0 0.0
    %43 = vmatpush1.msra.mxu0 0.0
    %44 = vmatprep.subr.mxu0 0.0
    %45 = vmatpush1.msra.mxu0 0.0
    %46 = vmatprep.subr.mxu0 0.0
    %47 = vmatpush1.msra.mxu0 0.0
    %48 = vmatprep.subr.mxu0 0.0
    %49 = vmatpush1.msra.mxu0 0.0
    %50 = vmatprep.subr.mxu0 0.0
    %51 = vmatpush1.msra.mxu0 0.0
    %52 = vmatprep.subr.mxu0 0.0
    %53 = vmatpush1.msra.mxu0 0.0
    %54 = vmatprep.subr.mxu0 0.0
    %55 = vmatpush1.msra.mxu0 0.0
    %56 = vmatprep.subr.mxu0 0.0
    %57 = vmatpush1.msra.mxu0 0.0
    %58 = vmatprep.subr.mxu0 0.0
    %59 = vmatpush1.msra.mxu0 0.0
    %60 = vmatprep.subr.mxu0 0.0
    %61 = vmatpush1.msra.mxu0 0.0
    %62 = vmatprep.subr.mxu0 0.0
    %63 = vmatpush1.msra.mxu0 0.0
    %64 = vmatprep.subr.mxu0 0.0
    %65 = vmatpush1.msra.mxu0 0.0
    %66 = vmatprep.subr.mxu0 0.0
    %67 = vmatpush1.msra.mxu0 0.0
    %68 = vmatprep.subr.mxu0 0.0
    %v69 = vand.u32 %v32, 4294901760
    %70 = vmatpush1.msra.mxu0 %v69
    %71 = vmatprep.subr.mxu0 0.0
    %v72 = vand.u32 %v31, 4294901760
    %73 = vmatpush1.msra.mxu0 %v72
    %74 = vmatprep.subr.mxu0 0.0
    %75 = vmatpush2.msra.mxu0 0.0
    %76 = vmatprep.subr.mxu0 0.0
    %77 = vmatpush2.msra.mxu0 0.0
    %78 = vmatprep.subr.mxu0 0.0
    %79 = vmatpush2.msra.mxu0 0.0
    %80 = vmatprep.subr.mxu0 0.0
    %81 = vmatpush2.msra.mxu0 0.0
    %82 = vmatprep.subr.mxu0 0.0
    %83 = vmatpush2.msra.mxu0 0.0
    %84 = vmatprep.subr.mxu0 0.0
    %85 = vmatpush2.msra.mxu0 0.0
    %86 = vmatprep.subr.mxu0 0.0
    %87 = vmatpush2.msra.mxu0 0.0
    %88 = vmatprep.subr.mxu0 0.0
    %89 = vmatpush2.msra.mxu0 0.0
    %90 = vmatprep.subr.mxu0 0.0
    %91 = vmatpush2.msra.mxu0 0.0
    %92 = vmatprep.subr.mxu0 0.0
    %93 = vmatpush2.msra.mxu0 0.0
    %94 = vmatprep.subr.mxu0 0.0
    %95 = vmatpush2.msra.mxu0 0.0
    %96 = vmatprep.subr.mxu0 0.0
    %97 = vmatpush2.msra.mxu0 0.0
    %98 = vmatprep.subr.mxu0 0.0
    %99 = vmatpush2.msra.mxu0 0.0
    %100 = vmatprep.subr.mxu0 0.0
    %101 = vmatpush2.msra.mxu0 0.0
    %102 = vmatprep.subr.mxu0 0.0
    %103 = vmatpush2.msra.mxu0 0.0
    %104 = vmatprep.subr.mxu0 0.0
    %105 = vmatpush2.msra.mxu0 0.0
    %106 = vmatprep.mubr.f32.mxu0 0.0
    %v107 = vand.u32 %v35, 4294901760
    %v108 = vsub.f32 %v35, %v107
    %v109 = vand.u32 %v108, 4294901760
    %v110 = vsub.f32 %v108, %v109
    %v111 = vand.u32 %v110, 4294901760
    %112 = vmatmul.mubr.f32.gmra.mxu0 %v111
    %v113 = vpop.f32.mrf.mxu0
    %v114 = vadd.f32 0.0, %v113
    %v115 = vpop.f32.mrf.mxu0
    %116 = vmatprep.mubr.f32.mxu0 0.0
    %v117 = vand.u32 %v38, 4294901760
    %v118 = vsub.f32 %v38, %v117
    %v119 = vand.u32 %v118, 4294901760
    %v120 = vsub.f32 %v118, %v119
    %v121 = vand.u32 %v120, 4294901760
    %122 = vmatmul.mubr.f32.gmra.mxu0 %v121
    %v123 = vpop.f32.mrf.mxu0
    %v124 = vadd.f32 0.0, %v123
    %v125 = vpop.f32.mrf.mxu0
    %126 = vdwg.mxu0
    %127 = vmatprep.subr.mxu0 0.0
    %128 = vmatpush1.msra.mxu0 0.0
    %129 = vmatprep.subr.mxu0 0.0
    %130 = vmatpush1.msra.mxu0 0.0
    %131 = vmatprep.subr.mxu0 0.0
    %132 = vmatpush1.msra.mxu0 0.0
    %133 = vmatprep.subr.mxu0 0.0
    %134 = vmatpush1.msra.mxu0 0.0
    %135 = vmatprep.subr.mxu0 0.0
    %136 = vmatpush1.msra.mxu0 0.0
    %137 = vmatprep.subr.mxu0 0.0
    %138 = vmatpush1.msra.mxu0 0.0
    %139 = vmatprep.subr.mxu0 0.0
    %140 = vmatpush1.msra.mxu0 0.0
    %141 = vmatprep.subr.mxu0 0.0
    %142 = vmatpush1.msra.mxu0 0.0
    %143 = vmatprep.subr.mxu0 0.0
    %144 = vmatpush1.msra.mxu0 0.0
    %145 = vmatprep.subr.mxu0 0.0
    %146 = vmatpush1.msra.mxu0 0.0
    %147 = vmatprep.subr.mxu0 0.0
    %148 = vmatpush1.msra.mxu0 0.0
    %149 = vmatprep.subr.mxu0 0.0
    %150 = vmatpush1.msra.mxu0 0.0
    %151 = vmatprep.subr.mxu0 0.0
    %152 = vmatpush1.msra.mxu0 0.0
    %153 = vmatprep.subr.mxu0 0.0
    %154 = vmatpush1.msra.mxu0 0.0
    %155 = vmatprep.subr.mxu0 0.0
    %v156 = vand.u32 %v32, 4294901760
    %v157 = vsub.f32 %v32, %v156
    %v158 = vand.u32 %v157, 4294901760
    %v159 = vsub.f32 %v157, %v158
    %v160 = vand.u32 %v159, 4294901760
    %161 = vmatpush1.msra.mxu0 %v160
    %162 = vmatprep.subr.mxu0 0.0
    %v163 = vand.u32 %v31, 4294901760
    %v164 = vsub.f32 %v31, %v163
    %v165 = vand.u32 %v164, 4294901760
    %v166 = vsub.f32 %v164, %v165
    %v167 = vand.u32 %v166, 4294901760
    %168 = vmatpush1.msra.mxu0 %v167
    %169 = vmatprep.subr.mxu0 0.0
    %170 = vmatpush2.msra.mxu0 0.0
    %171 = vmatprep.subr.mxu0 0.0
    %172 = vmatpush2.msra.mxu0 0.0
    %173 = vmatprep.subr.mxu0 0.0
    %174 = vmatpush2.msra.mxu0 0.0
    %175 = vmatprep.subr.mxu0 0.0
    %176 = vmatpush2.msra.mxu0 0.0
    %177 = vmatprep.subr.mxu0 0.0
    %178 = vmatpush2.msra.mxu0 0.0
    %179 = vmatprep.subr.mxu0 0.0
    %180 = vmatpush2.msra.mxu0 0.0
    %181 = vmatprep.subr.mxu0 0.0
    %182 = vmatpush2.msra.mxu0 0.0
    %183 = vmatprep.subr.mxu0 0.0
    %184 = vmatpush2.msra.mxu0 0.0
    %185 = vmatprep.subr.mxu0 0.0
    %186 = vmatpush2.msra.mxu0 0.0
    %187 = vmatprep.subr.mxu0 0.0
    %188 = vmatpush2.msra.mxu0 0.0
    %189 = vmatprep.subr.mxu0 0.0
    %190 = vmatpush2.msra.mxu0 0.0
    %191 = vmatprep.subr.mxu0 0.0
    %192 = vmatpush2.msra.mxu0 0.0
    %193 = vmatprep.subr.mxu0 0.0
    %194 = vmatpush2.msra.mxu0 0.0
    %195 = vmatprep.subr.mxu0 0.0
    %196 = vmatpush2.msra.mxu0 0.0
    %197 = vmatprep.subr.mxu0 0.0
    %198 = vmatpush2.msra.mxu0 0.0
    %199 = vmatprep.subr.mxu0 0.0
    %200 = vmatpush2.msra.mxu0 0.0
    %201 = vmatprep.mubr.f32.mxu0 0.0
    %v202 = vand.u32 %v35, 4294901760
    %203 = vmatmul.mubr.f32.gmra.mxu0 %v202
    %v204 = vpop.f32.mrf.mxu0
    %v205 = vadd.f32 %v114, %v204
    %v206 = vpop.f32.mrf.mxu0
    %207 = vmatprep.mubr.f32.mxu0 0.0
    %v208 = vand.u32 %v38, 4294901760
    %209 = vmatmul.mubr.f32.gmra.mxu0 %v208
    %v210 = vpop.f32.mrf.mxu0
    %v211 = vadd.f32 %v124, %v210
    %v212 = vpop.f32.mrf.mxu0
    %213 = vdwg.mxu0
    %214 = vmatprep.subr.mxu0 0.0
    %215 = vmatpush1.msra.mxu0 0.0
    %216 = vmatprep.subr.mxu0 0.0
    %217 = vmatpush1.msra.mxu0 0.0
    %218 = vmatprep.subr.mxu0 0.0
    %219 = vmatpush1.msra.mxu0 0.0
    %220 = vmatprep.subr.mxu0 0.0
    %221 = vmatpush1.msra.mxu0 0.0
    %222 = vmatprep.subr.mxu0 0.0
    %223 = vmatpush1.msra.mxu0 0.0
    %224 = vmatprep.subr.mxu0 0.0
    %225 = vmatpush1.msra.mxu0 0.0
    %226 = vmatprep.subr.mxu0 0.0
    %227 = vmatpush1.msra.mxu0 0.0
    %228 = vmatprep.subr.mxu0 0.0
    %229 = vmatpush1.msra.mxu0 0.0
    %230 = vmatprep.subr.mxu0 0.0
    %231 = vmatpush1.msra.mxu0 0.0
    %232 = vmatprep.subr.mxu0 0.0
    %233 = vmatpush1.msra.mxu0 0.0
    %234 = vmatprep.subr.mxu0 0.0
    %235 = vmatpush1.msra.mxu0 0.0
    %236 = vmatprep.subr.mxu0 0.0
    %237 = vmatpush1.msra.mxu0 0.0
    %238 = vmatprep.subr.mxu0 0.0
    %239 = vmatpush1.msra.mxu0 0.0
    %240 = vmatprep.subr.mxu0 0.0
    %241 = vmatpush1.msra.mxu0 0.0
    %242 = vmatprep.subr.mxu0 0.0
    %v243 = vand.u32 %v32, 4294901760
    %v244 = vsub.f32 %v32, %v243
    %245 = vmatpush1.msra.mxu0 %v244
    %246 = vmatprep.subr.mxu0 0.0
    %v247 = vand.u32 %v31, 4294901760
    %v248 = vsub.f32 %v31, %v247
    %249 = vmatpush1.msra.mxu0 %v248
    %250 = vmatprep.subr.mxu0 0.0
    %251 = vmatpush2.msra.mxu0 0.0
    %252 = vmatprep.subr.mxu0 0.0
    %253 = vmatpush2.msra.mxu0 0.0
    %254 = vmatprep.subr.mxu0 0.0
    %255 = vmatpush2.msra.mxu0 0.0
    %256 = vmatprep.subr.mxu0 0.0
    %257 = vmatpush2.msra.mxu0 0.0
    %258 = vmatprep.subr.mxu0 0.0
    %259 = vmatpush2.msra.mxu0 0.0
    %260 = vmatprep.subr.mxu0 0.0
    %261 = vmatpush2.msra.mxu0 0.0
    %262 = vmatprep.subr.mxu0 0.0
    %263 = vmatpush2.msra.mxu0 0.0
    %264 = vmatprep.subr.mxu0 0.0
    %265 = vmatpush2.msra.mxu0 0.0
    %266 = vmatprep.subr.mxu0 0.0
    %267 = vmatpush2.msra.mxu0 0.0
    %268 = vmatprep.subr.mxu0 0.0
    %269 = vmatpush2.msra.mxu0 0.0
    %270 = vmatprep.subr.mxu0 0.0
    %271 = vmatpush2.msra.mxu0 0.0
    %272 = vmatprep.subr.mxu0 0.0
    %273 = vmatpush2.msra.mxu0 0.0
    %274 = vmatprep.subr.mxu0 0.0
    %275 = vmatpush2.msra.mxu0 0.0
    %276 = vmatprep.subr.mxu0 0.0
    %277 = vmatpush2.msra.mxu0 0.0
    %278 = vmatprep.subr.mxu0 0.0
    %279 = vmatpush2.msra.mxu0 0.0
    %280 = vmatprep.subr.mxu0 0.0
    %281 = vmatpush2.msra.mxu0 0.0
    %282 = vmatprep.mubr.f32.mxu0 0.0
    %v283 = vand.u32 %v35, 4294901760
    %v284 = vsub.f32 %v35, %v283
    %285 = vmatmul.mubr.f32.gmra.mxu0 %v284
    %v286 = vpop.f32.mrf.mxu0
    %v287 = vadd.f32 %v205, %v286
    %v288 = vpop.f32.mrf.mxu0
    %289 = vmatprep.mubr.f32.mxu0 0.0
    %v290 = vand.u32 %v38, 4294901760
    %v291 = vsub.f32 %v38, %v290
    %292 = vmatmul.mubr.f32.gmra.mxu0 %v291
    %v293 = vpop.f32.mrf.mxu0
    %v294 = vadd.f32 %v211, %v293
    %v295 = vpop.f32.mrf.mxu0
    %296 = vdwg.mxu0
    %297 = vmatprep.subr.mxu0 0.0
    %298 = vmatpush1.msra.mxu0 0.0
    %299 = vmatprep.subr.mxu0 0.0
    %300 = vmatpush1.msra.mxu0 0.0
    %301 = vmatprep.subr.mxu0 0.0
    %302 = vmatpush1.msra.mxu0 0.0
    %303 = vmatprep.subr.mxu0 0.0
    %304 = vmatpush1.msra.mxu0 0.0
    %305 = vmatprep.subr.mxu0 0.0
    %306 = vmatpush1.msra.mxu0 0.0
    %307 = vmatprep.subr.mxu0 0.0
    %308 = vmatpush1.msra.mxu0 0.0
    %309 = vmatprep.subr.mxu0 0.0
    %310 = vmatpush1.msra.mxu0 0.0
    %311 = vmatprep.subr.mxu0 0.0
    %312 = vmatpush1.msra.mxu0 0.0
    %313 = vmatprep.subr.mxu0 0.0
    %314 = vmatpush1.msra.mxu0 0.0
    %315 = vmatprep.subr.mxu0 0.0
    %316 = vmatpush1.msra.mxu0 0.0
    %317 = vmatprep.subr.mxu0 0.0
    %318 = vmatpush1.msra.mxu0 0.0
    %319 = vmatprep.subr.mxu0 0.0
    %320 = vmatpush1.msra.mxu0 0.0
    %321 = vmatprep.subr.mxu0 0.0
    %322 = vmatpush1.msra.mxu0 0.0
    %323 = vmatprep.subr.mxu0 0.0
    %324 = vmatpush1.msra.mxu0 0.0
    %325 = vmatprep.subr.mxu0 0.0
    %v326 = vand.u32 %v32, 4294901760
    %327 = vmatpush1.msra.mxu0 %v326
    %328 = vmatprep.subr.mxu0 0.0
    %v329 = vand.u32 %v31, 4294901760
    %330 = vmatpush1.msra.mxu0 %v329
    %331 = vmatprep.subr.mxu0 0.0
    %332 = vmatpush2.msra.mxu0 0.0
    %333 = vmatprep.subr.mxu0 0.0
    %334 = vmatpush2.msra.mxu0 0.0
    %335 = vmatprep.subr.mxu0 0.0
    %336 = vmatpush2.msra.mxu0 0.0
    %337 = vmatprep.subr.mxu0 0.0
    %338 = vmatpush2.msra.mxu0 0.0
    %339 = vmatprep.subr.mxu0 0.0
    %340 = vmatpush2.msra.mxu0 0.0
    %341 = vmatprep.subr.mxu0 0.0
    %342 = vmatpush2.msra.mxu0 0.0
    %343 = vmatprep.subr.mxu0 0.0
    %344 = vmatpush2.msra.mxu0 0.0
    %345 = vmatprep.subr.mxu0 0.0
    %346 = vmatpush2.msra.mxu0 0.0
    %347 = vmatprep.subr.mxu0 0.0
    %348 = vmatpush2.msra.mxu0 0.0
    %349 = vmatprep.subr.mxu0 0.0
    %350 = vmatpush2.msra.mxu0 0.0
    %351 = vmatprep.subr.mxu0 0.0
    %352 = vmatpush2.msra.mxu0 0.0
    %353 = vmatprep.subr.mxu0 0.0
    %354 = vmatpush2.msra.mxu0 0.0
    %355 = vmatprep.subr.mxu0 0.0
    %356 = vmatpush2.msra.mxu0 0.0
    %357 = vmatprep.subr.mxu0 0.0
    %358 = vmatpush2.msra.mxu0 0.0
    %359 = vmatprep.subr.mxu0 0.0
    %360 = vmatpush2.msra.mxu0 0.0
    %361 = vmatprep.subr.mxu0 0.0
    %362 = vmatpush2.msra.mxu0 0.0
    %363 = vmatprep.mubr.f32.mxu0 0.0
    %v364 = vand.u32 %v35, 4294901760
    %v365 = vsub.f32 %v35, %v364
    %v366 = vand.u32 %v365, 4294901760
    %367 = vmatmul.mubr.f32.gmra.mxu0 %v366
    %v368 = vpop.f32.mrf.mxu0
    %v369 = vadd.f32 %v287, %v368
    %v370 = vpop.f32.mrf.mxu0
    %371 = vmatprep.mubr.f32.mxu0 0.0
    %v372 = vand.u32 %v38, 4294901760
    %v373 = vsub.f32 %v38, %v372
    %v374 = vand.u32 %v373, 4294901760
    %375 = vmatmul.mubr.f32.gmra.mxu0 %v374
    %v376 = vpop.f32.mrf.mxu0
    %v377 = vadd.f32 %v294, %v376
    %v378 = vpop.f32.mrf.mxu0
    %379 = vdwg.mxu0
    %380 = vmatprep.subr.mxu0 0.0
    %381 = vmatpush1.msra.mxu0 0.0
    %382 = vmatprep.subr.mxu0 0.0
    %383 = vmatpush1.msra.mxu0 0.0
    %384 = vmatprep.subr.mxu0 0.0
    %385 = vmatpush1.msra.mxu0 0.0
    %386 = vmatprep.subr.mxu0 0.0
    %387 = vmatpush1.msra.mxu0 0.0
    %388 = vmatprep.subr.mxu0 0.0
    %389 = vmatpush1.msra.mxu0 0.0
    %390 = vmatprep.subr.mxu0 0.0
    %391 = vmatpush1.msra.mxu0 0.0
    %392 = vmatprep.subr.mxu0 0.0
    %393 = vmatpush1.msra.mxu0 0.0
    %394 = vmatprep.subr.mxu0 0.0
    %395 = vmatpush1.msra.mxu0 0.0
    %396 = vmatprep.subr.mxu0 0.0
    %397 = vmatpush1.msra.mxu0 0.0
    %398 = vmatprep.subr.mxu0 0.0
    %399 = vmatpush1.msra.mxu0 0.0
    %400 = vmatprep.subr.mxu0 0.0
    %401 = vmatpush1.msra.mxu0 0.0
    %402 = vmatprep.subr.mxu0 0.0
    %403 = vmatpush1.msra.mxu0 0.0
    %404 = vmatprep.subr.mxu0 0.0
    %405 = vmatpush1.msra.mxu0 0.0
    %406 = vmatprep.subr.mxu0 0.0
    %407 = vmatpush1.msra.mxu0 0.0
    %408 = vmatprep.subr.mxu0 0.0
    %v409 = vand.u32 %v32, 4294901760
    %v410 = vsub.f32 %v32, %v409
    %v411 = vand.u32 %v410, 4294901760
    %412 = vmatpush1.msra.mxu0 %v411
    %413 = vmatprep.subr.mxu0 0.0
    %v414 = vand.u32 %v31, 4294901760
    %v415 = vsub.f32 %v31, %v414
    %v416 = vand.u32 %v415, 4294901760
    %417 = vmatpush1.msra.mxu0 %v416
    %418 = vmatprep.subr.mxu0 0.0
    %419 = vmatpush2.msra.mxu0 0.0
    %420 = vmatprep.subr.mxu0 0.0
    %421 = vmatpush2.msra.mxu0 0.0
    %422 = vmatprep.subr.mxu0 0.0
    %423 = vmatpush2.msra.mxu0 0.0
    %424 = vmatprep.subr.mxu0 0.0
    %425 = vmatpush2.msra.mxu0 0.0
    %426 = vmatprep.subr.mxu0 0.0
    %427 = vmatpush2.msra.mxu0 0.0
    %428 = vmatprep.subr.mxu0 0.0
    %429 = vmatpush2.msra.mxu0 0.0
    %430 = vmatprep.subr.mxu0 0.0
    %431 = vmatpush2.msra.mxu0 0.0
    %432 = vmatprep.subr.mxu0 0.0
    %433 = vmatpush2.msra.mxu0 0.0
    %434 = vmatprep.subr.mxu0 0.0
    %435 = vmatpush2.msra.mxu0 0.0
    %436 = vmatprep.subr.mxu0 0.0
    %437 = vmatpush2.msra.mxu0 0.0
    %438 = vmatprep.subr.mxu0 0.0
    %439 = vmatpush2.msra.mxu0 0.0
    %440 = vmatprep.subr.mxu0 0.0
    %441 = vmatpush2.msra.mxu0 0.0
    %442 = vmatprep.subr.mxu0 0.0
    %443 = vmatpush2.msra.mxu0 0.0
    %444 = vmatprep.subr.mxu0 0.0
    %445 = vmatpush2.msra.mxu0 0.0
    %446 = vmatprep.subr.mxu0 0.0
    %447 = vmatpush2.msra.mxu0 0.0
    %448 = vmatprep.subr.mxu0 0.0
    %449 = vmatpush2.msra.mxu0 0.0
    %450 = vmatprep.mubr.f32.mxu0 0.0
    %v451 = vand.u32 %v35, 4294901760
    %452 = vmatmul.mubr.f32.gmra.mxu0 %v451
    %v453 = vpop.f32.mrf.mxu0
    %v454 = vadd.f32 %v369, %v453
    %v455 = vpop.f32.mrf.mxu0
    %456 = vmatprep.mubr.f32.mxu0 0.0
    %v457 = vand.u32 %v38, 4294901760
    %458 = vmatmul.mubr.f32.gmra.mxu0 %v457
    %v459 = vpop.f32.mrf.mxu0
    %v460 = vadd.f32 %v377, %v459
    %v461 = vpop.f32.mrf.mxu0
    %462 = vdwg.mxu0
    %463 = vmatprep.subr.mxu0 0.0
    %464 = vmatpush1.msra.mxu0 0.0
    %465 = vmatprep.subr.mxu0 0.0
    %466 = vmatpush1.msra.mxu0 0.0
    %467 = vmatprep.subr.mxu0 0.0
    %468 = vmatpush1.msra.mxu0 0.0
    %469 = vmatprep.subr.mxu0 0.0
    %470 = vmatpush1.msra.mxu0 0.0
    %471 = vmatprep.subr.mxu0 0.0
    %472 = vmatpush1.msra.mxu0 0.0
    %473 = vmatprep.subr.mxu0 0.0
    %474 = vmatpush1.msra.mxu0 0.0
    %475 = vmatprep.subr.mxu0 0.0
    %476 = vmatpush1.msra.mxu0 0.0
    %477 = vmatprep.subr.mxu0 0.0
    %478 = vmatpush1.msra.mxu0 0.0
    %479 = vmatprep.subr.mxu0 0.0
    %480 = vmatpush1.msra.mxu0 0.0
    %481 = vmatprep.subr.mxu0 0.0
    %482 = vmatpush1.msra.mxu0 0.0
    %483 = vmatprep.subr.mxu0 0.0
    %484 = vmatpush1.msra.mxu0 0.0
    %485 = vmatprep.subr.mxu0 0.0
    %486 = vmatpush1.msra.mxu0 0.0
    %487 = vmatprep.subr.mxu0 0.0
    %488 = vmatpush1.msra.mxu0 0.0
    %489 = vmatprep.subr.mxu0 0.0
    %490 = vmatpush1.msra.mxu0 0.0
    %491 = vmatprep.subr.mxu0 0.0
    %v492 = vand.u32 %v32, 4294901760
    %493 = vmatpush1.msra.mxu0 %v492
    %494 = vmatprep.subr.mxu0 0.0
    %v495 = vand.u32 %v31, 4294901760
    %496 = vmatpush1.msra.mxu0 %v495
    %497 = vmatprep.subr.mxu0 0.0
    %498 = vmatpush2.msra.mxu0 0.0
    %499 = vmatprep.subr.mxu0 0.0
    %500 = vmatpush2.msra.mxu0 0.0
    %501 = vmatprep.subr.mxu0 0.0
    %502 = vmatpush2.msra.mxu0 0.0
    %503 = vmatprep.subr.mxu0 0.0
    %504 = vmatpush2.msra.mxu0 0.0
    %505 = vmatprep.subr.mxu0 0.0
    %506 = vmatpush2.msra.mxu0 0.0
    %507 = vmatprep.subr.mxu0 0.0
    %508 = vmatpush2.msra.mxu0 0.0
    %509 = vmatprep.subr.mxu0 0.0
    %510 = vmatpush2.msra.mxu0 0.0
    %511 = vmatprep.subr.mxu0 0.0
    %512 = vmatpush2.msra.mxu0 0.0
    %513 = vmatprep.subr.mxu0 0.0
    %514 = vmatpush2.msra.mxu0 0.0
    %515 = vmatprep.subr.mxu0 0.0
    %516 = vmatpush2.msra.mxu0 0.0
    %517 = vmatprep.subr.mxu0 0.0
    %518 = vmatpush2.msra.mxu0 0.0
    %519 = vmatprep.subr.mxu0 0.0
    %520 = vmatpush2.msra.mxu0 0.0
    %521 = vmatprep.subr.mxu0 0.0
    %522 = vmatpush2.msra.mxu0 0.0
    %523 = vmatprep.subr.mxu0 0.0
    %524 = vmatpush2.msra.mxu0 0.0
    %525 = vmatprep.subr.mxu0 0.0
    %526 = vmatpush2.msra.mxu0 0.0
    %527 = vmatprep.subr.mxu0 0.0
    %528 = vmatpush2.msra.mxu0 0.0
    %529 = vmatprep.mubr.f32.mxu0 0.0
    %v530 = vand.u32 %v35, 4294901760
    %531 = vmatmul.mubr.f32.gmra.mxu0 %v530
    %v532 = vpop.f32.mrf.mxu0
    %v533 = vadd.f32 %v454, %v532
    %v534 = vpop.f32.mrf.mxu0
    %535 = vmatprep.mubr.f32.mxu0 0.0
    %v536 = vand.u32 %v38, 4294901760
    %537 = vmatmul.mubr.f32.gmra.mxu0 %v536
    %v538 = vpop.f32.mrf.mxu0
    %v539 = vadd.f32 %v460, %v538
    %v540 = vpop.f32.mrf.mxu0
    %541 = vdwg.mxu0
    %v542 = vld [vmem:[%s1] sm:$0xff]
    %v543 = vld [vmem:[%s1 + $0x8] sm:$0xff]
    %545 = vset.pattern.permute.xlu0 0
    %546 = vperm.xlu0 %545, %v542
    %v547 = vpop.permute.xlu0 %546
    %550 = vset.pattern.permute.xlu0 0
    %551 = vperm.xlu0 %550, %v543
    %v552 = vpop.permute.xlu0 %551
    %v554 = vmul.f32 %v533, %v547
    %v555 = vmul.f32 %v539, %v552
    %556 = vst.msk [vmem:[#allocation2] sm:$0xff] %vm33, %v554
    %557 = vst.msk [vmem:[#allocation2 + $0x8] sm:$0xff] %vm33, %v555
    // Predicated region
    $region14: #{tpu_custom_call.1} parent=1 // pred_check
      _
    $region15: #{tpu_custom_call.1} parent=1 // pred_check_branch
      %559 = sbr.rel (0) target = $region17
    $region16: #{tpu_custom_call.1} parent=1 // pred_region
      %s561 = ssub.s32 256, 256
      %562 = vsyncadd [#allocation3], %s561
      %s563 = sshll.u32 [#allocation2], 4
      %s564 = int_to_ptr.vmem [resolvable:$true] %s563
      %569 = dma.vmem_to_hbm [thread:$0]  %s564, 256, %s3, [#allocation3], 128, 128, 8
    $region17: #{tpu_custom_call.1} parent=1 // pred_fallthru
      _
    // Predicated region
    $region18: #{tpu_custom_call.1} parent=1 // pred_check
      _
    $region19: #{tpu_custom_call.1} parent=1 // pred_check_branch
      %571 = sbr.rel (0) target = $region21
    $region20: #{tpu_custom_call.1} parent=1 // pred_region
      %572 = dma.done [#allocation3], 256
    $region21: #{tpu_custom_call.1} parent=1 // pred_fallthru
      _
    %573 = vsyncpa [#allocation3], 1

</llo_original>
